<compile_context>
chip_gen: v7x
topology: tpu7x:2x2x1
jax: 0.10.0
libtpu: 0.0.40
codegen_flags: <defaults>
</compile_context>

<pallas_src>
import jax
import jax.numpy as jnp
from jax.experimental import pallas as pl
from jax.experimental.pallas import tpu as pltpu


# --------------------------------------------------------------------------- #
# Kernel
# --------------------------------------------------------------------------- #
def _se_kernel(x_ref, w1_ref, b1_ref, w2_ref, b2_ref, o_ref):
    """x_ref / o_ref: (Nb, C, HW) with HW on lanes.  Weights pre-transposed:
    w1 (C, Cr), b1 (1, Cr), w2 (Cr, C), b2 (1, C)."""
    x = x_ref[...]

    # Squeeze: global average pool over HW (cross-lane reduce), f32 accumulate.
    mean = jnp.mean(x.astype(jnp.float32), axis=2)                        # (Nb, C)

    # conv_reduce (1x1) + ReLU, then conv_expand (1x1): tiny batched matvecs
    # on the MXU; latency-only, hidden under the activation DMA.
    se = jnp.dot(mean, w1_ref[...].astype(jnp.float32),
                 preferred_element_type=jnp.float32)                      # (Nb, Cr)
    se = jnp.maximum(se + b1_ref[...].astype(jnp.float32), 0.0)
    se = jnp.dot(se, w2_ref[...].astype(jnp.float32),
                 preferred_element_type=jnp.float32)                      # (Nb, C)
    gate = jax.nn.sigmoid(se + b2_ref[...].astype(jnp.float32))           # (Nb, C)
    gate = gate.astype(x.dtype)

    # Excite: per-(n, c) scalar broadcast across the HW lanes (VPU work,
    # hidden under the HBM DMA on all generations).
    o_ref[...] = (x * gate[:, :, None]).astype(o_ref.dtype)


# --------------------------------------------------------------------------- #
# Sizing helpers (padding- and generation-aware)
# --------------------------------------------------------------------------- #
def _round_up(x, m):
    return ((x + m - 1) // m) * m


def _padded_tile_bytes(shape, dtype):
    """Physical VMEM footprint of one tile: lane dim padded to 128, sublane
    dim padded to 8 (f32) / 16 (bf16) / 32 (int8)."""
    itemsize = jnp.dtype(dtype).itemsize
    shape = tuple(int(d) for d in shape)
    if len(shape) < 2:
        shape = (1,) * (2 - len(shape)) + shape
    lead = 1
    for d in shape[:-2]:
        lead *= d
    sub_mult = max(8, 32 // itemsize)
    sub = _round_up(shape[-2], sub_mult)
    lane = _round_up(shape[-1], 128)
    return lead * sub * lane * itemsize


def _tpu_vmem_and_two_tc():
    """(physical VMEM bytes per core, chip has 2 TensorCores sharing the grid)."""
    vmem_cap = 64 << 20  # conservative fallback (v7x-sized)
    try:
        vmem_cap = int(pltpu.get_tpu_info().vmem_capacity_bytes)
    except Exception:
        pass
    two_tc = False
    try:
        kind = jax.devices()[0].device_kind.lower()
        two_tc = ("v7" in kind) or ("7x" in kind) or ("v4" in kind)
    except Exception:
        pass
    return vmem_cap, two_tc


# --------------------------------------------------------------------------- #
# Wrapper
# --------------------------------------------------------------------------- #
def squeeze_excite(x_nchw, w_reduce, b_reduce, w_expand, b_expand,
                   *, block_batch=None, vmem_fraction=0.8):
    """SqueezeExcite forward.

    x_nchw: (N, C, H, W).
    w_reduce: (Cr, C) or (Cr, C, 1, 1);  b_reduce: (Cr,)
    w_expand: (C, Cr) or (C, Cr, 1, 1);  b_expand: (C,)
    """
    N, C, H, W = x_nchw.shape
    HW = H * W
    Cr = w_reduce.shape[0]

    # Free contiguous views — no HBM transpose passes.
    x = x_nchw.reshape(N, C, HW)

    # Pre-transpose 1x1-conv weights so the kernel does plain (Nb,.)@(.,.) matmuls.
    w1 = w_reduce.reshape(Cr, C).T          # (C, Cr)
    w2 = w_expand.reshape(C, Cr).T          # (Cr, C)
    b1 = b_reduce.reshape(1, Cr)
    b2 = b_expand.reshape(1, C)

    vmem_cap, two_tc = _tpu_vmem_and_two_tc()

    # Padded weight footprint; single-buffer constants only when big enough
    # for double-buffer waste to matter.
    w_bytes = sum(_padded_tile_bytes(a.shape, a.dtype) for a in (w1, b1, w2, b2))
    single_buffer_weights = w_bytes > (512 << 10)
    weight_bufs = 1 if single_buffer_weights else 2

    # Padded activation footprint for one batch element's (C, HW) slab.
    per_batch = _padded_tile_bytes((C, HW), x.dtype)

    total_target = min(int(vmem_cap * vmem_fraction), vmem_cap - (8 << 20))
    act_budget = max(total_target - weight_bufs * w_bytes - (4 << 20),
                     4 * per_batch)

    if block_batch is None:
        nb = max(1, act_budget // (4 * per_batch))      # in + out, double buffered
        nb = min(nb, N)
        if two_tc and N >= 2:
            nb = min(nb, pl.cdiv(N, 2))                 # >= 2 steps only when megacore
        block_batch = int(nb)
    nb = int(min(block_batch, N))
    grid = (pl.cdiv(N, nb),)
    # Note: for batch-1 serving on v7x an in-step HW-chunk pipeline
    # (pltpu.emit_pipeline over HW with an f32 sum carry) would hide the DMA
    # when the grid has <2 steps per core; not needed at these shapes.

    const_kwargs = dict(pipeline_mode=pl.Buffered(1)) if single_buffer_weights else {}

    def const_spec(shape):
        return pl.BlockSpec(shape, lambda n: (0, 0), **const_kwargs)

    act_spec = pl.BlockSpec((nb, C, HW), lambda n: (n, 0, 0))

    # Padding-aware VMEM limit: padded activations (in+out, double buffered)
    # + resident weights + internal-scratch slack, capped below physical VMEM.
    vmem_limit = 4 * nb * per_batch + weight_bufs * w_bytes + (4 << 20)
    vmem_limit = int(min(max(vmem_limit, 32 << 20), int(vmem_cap * 0.9)))

    out = pl.pallas_call(
        _se_kernel,
        out_shape=jax.ShapeDtypeStruct((N, C, HW), x.dtype),
        grid_spec=pltpu.PrefetchScalarGridSpec(
            num_scalar_prefetch=0,
            grid=grid,
            in_specs=[
                act_spec,
                const_spec((C, Cr)),
                const_spec((1, Cr)),
                const_spec((Cr, C)),
                const_spec((1, C)),
            ],
            out_specs=act_spec,
        ),
        compiler_params=pltpu.CompilerParams(
            dimension_semantics=("parallel",),
            vmem_limit_bytes=vmem_limit),
    )(x, w1, b1, w2, b2)

    return out.reshape(N, C, H, W)


# --------------------------------------------------------------------------- #
# Pure-JAX reference (mirrors the PyTorch forward)
# --------------------------------------------------------------------------- #
def _reference(x, w_reduce, b_reduce, w_expand, b_expand):
    N, C, H, W = x.shape
    Cr = w_reduce.shape[0]
    hp = jax.lax.Precision.HIGHEST
    se = x.reshape(N, C, -1).astype(jnp.float32).mean(-1)                   # (N, C)
    se = jnp.dot(se, w_reduce.reshape(Cr, C).T.astype(jnp.float32), precision=hp)
    se = jnp.maximum(se + b_reduce.astype(jnp.float32), 0.0)
    se = jnp.dot(se, w_expand.reshape(C, Cr).T.astype(jnp.float32), precision=hp)
    gate = jax.nn.sigmoid(se + b_expand.astype(jnp.float32)).astype(x.dtype)
    return x * gate[:, :, None, None]


if __name__ == "__main__":
    key = jax.random.PRNGKey(0)

    def run_case(N, C, H, W, Cr, case_key, dtype=jnp.float32,
                 block_batch=None, atol=1e-4, rtol=1e-4):
        k_x, k_w1, k_b1, k_w2, k_b2 = jax.random.split(case_key, 5)
        x = jax.random.normal(k_x, (N, C, H, W), dtype=jnp.float32).astype(dtype)
        # nn.Conv2d(in_chs, reduced_chs, 1) -> weight (Cr, C, 1, 1); squeezed.
        w_reduce = (jax.random.normal(k_w1, (Cr, C), jnp.float32) * 0.5).astype(dtype)
        b_reduce = (jax.random.normal(k_b1, (Cr,), jnp.float32) * 0.1).astype(dtype)
        w_expand = (jax.random.normal(k_w2, (C, Cr), jnp.float32) * 0.5).astype(dtype)
        b_expand = (jax.random.normal(k_b2, (C,), jnp.float32) * 0.1).astype(dtype)

        out = jax.block_until_ready(
            squeeze_excite(x, w_reduce, b_reduce, w_expand, b_expand,
                           block_batch=block_batch))
        ref = _reference(x, w_reduce, b_reduce, w_expand, b_expand)
        assert out.shape == (N, C, H, W)
        assert out.dtype == x.dtype
        assert jnp.allclose(out.astype(jnp.float32), ref.astype(jnp.float32),
                            atol=atol, rtol=rtol), \
            f"mismatch vs reference for shape {(N, C, H, W)} dtype {dtype}"

    k1, k2, k3, k4 = jax.random.split(key, 4)
    # Small spec-default shape: C=4, HW=256 (lane-dense HW), single grid step.
    run_case(2, 4, 16, 16, 2, k1)
    # SE-typical shape (C >> HW): HW=49 on lanes; padding-aware VMEM sizing.
    run_case(2, 256, 7, 7, 64, k2)
    # Forced multi-step grid: exercises weight reuse + cross-step pipelining.
    run_case(4, 256, 7, 7, 64, k3, block_batch=2)
    # bf16 activations/weights (half the HBM bytes); f32 accumulation inside.
    run_case(2, 128, 7, 7, 32, k4, dtype=jnp.bfloat16, atol=2e-2, rtol=2e-2)

    print("KERNEL_OK")
</pallas_src>

<mosaic_0001>
module attributes {stable_mosaic.version = 11 : i64} {
  func.func @_se_kernel(%arg0: i32, %arg1: memref<2x4x256xf32, #tpu.memory_space<vmem>>, %arg2: memref<4x2xf32, #tpu.memory_space<vmem>>, %arg3: memref<1x2xf32, #tpu.memory_space<vmem>>, %arg4: memref<2x4xf32, #tpu.memory_space<vmem>>, %arg5: memref<1x4xf32, #tpu.memory_space<vmem>>, %arg6: memref<2x4x256xf32, #tpu.memory_space<vmem>>) attributes {dimension_semantics = [#tpu.dimension_semantics<parallel>], iteration_bounds = array<i64: 1>, scalar_prefetch = 0 : i64, scratch_operands = 0 : i64, tpu.core_type = #tpu.core_type<tc>, window_params = [{transform_indices = @transform_0, window_bounds = array<i64: 2, 4, 256>}, {pipeline_mode = #tpu.pipeline_mode<synchronous>, transform_indices = @transform_1, window_bounds = array<i64: 4, 2>}, {pipeline_mode = #tpu.pipeline_mode<synchronous>, transform_indices = @transform_2, window_bounds = array<i64: 1, 2>}, {pipeline_mode = #tpu.pipeline_mode<synchronous>, transform_indices = @transform_3, window_bounds = array<i64: 2, 4>}, {pipeline_mode = #tpu.pipeline_mode<synchronous>, transform_indices = @transform_4, window_bounds = array<i64: 1, 4>}, {transform_indices = @transform_5, window_bounds = array<i64: 2, 4, 256>}]} {
    %c0 = arith.constant 0 : index
    %c0_0 = arith.constant 0 : index
    %c0_1 = arith.constant 0 : index
    %0 = vector.load %arg1[%c0, %c0_0, %c0_1] : memref<2x4x256xf32, #tpu.memory_space<vmem>>, vector<2x4x256xf32>
    %cst = arith.constant dense<0.000000e+00> : vector<2x4xf32>
    %1 = vector.multi_reduction <add>, %0, %cst [2] : vector<2x4x256xf32> to vector<2x4xf32>
    %cst_2 = arith.constant 2.560000e+02 : f32
    %2 = vector.broadcast %cst_2 : f32 to vector<2x4xf32>
    %3 = arith.divf %1, %2 : vector<2x4xf32>
    %c0_3 = arith.constant 0 : index
    %c0_4 = arith.constant 0 : index
    %4 = vector.load %arg2[%c0_3, %c0_4] : memref<4x2xf32, #tpu.memory_space<vmem>>, vector<4x2xf32>
    %cst_5 = arith.constant dense<0.000000e+00> : vector<2x2xf32>
    %5 = tpu.matmul %3, %4, %cst_5 {dimension_numbers = #tpu.dot_dimension_numbers<[1], [0], [0], [1], [0, 0, 1, 1], [], []>} : vector<2x4xf32>, vector<4x2xf32>, vector<2x2xf32> -> vector<2x2xf32>
    %c0_6 = arith.constant 0 : index
    %c0_7 = arith.constant 0 : index
    %6 = vector.load %arg3[%c0_6, %c0_7] : memref<1x2xf32, #tpu.memory_space<vmem>>, vector<1x2xf32>
    %7 = vector.broadcast %6 : vector<1x2xf32> to vector<2x2xf32>
    %8 = arith.addf %5, %7 : vector<2x2xf32>
    %cst_8 = arith.constant 0.000000e+00 : f32
    %9 = vector.broadcast %cst_8 : f32 to vector<2x2xf32>
    %10 = arith.maximumf %8, %9 : vector<2x2xf32>
    %c0_9 = arith.constant 0 : index
    %c0_10 = arith.constant 0 : index
    %11 = vector.load %arg4[%c0_9, %c0_10] : memref<2x4xf32, #tpu.memory_space<vmem>>, vector<2x4xf32>
    %cst_11 = arith.constant dense<0.000000e+00> : vector<2x4xf32>
    %12 = tpu.matmul %10, %11, %cst_11 {dimension_numbers = #tpu.dot_dimension_numbers<[1], [0], [0], [1], [0, 0, 1, 1], [], []>} : vector<2x2xf32>, vector<2x4xf32>, vector<2x4xf32> -> vector<2x4xf32>
    %c0_12 = arith.constant 0 : index
    %c0_13 = arith.constant 0 : index
    %13 = vector.load %arg5[%c0_12, %c0_13] : memref<1x4xf32, #tpu.memory_space<vmem>>, vector<1x4xf32>
    %14 = vector.broadcast %13 : vector<1x4xf32> to vector<2x4xf32>
    %15 = arith.addf %12, %14 : vector<2x4xf32>
    %16 = arith.negf %15 : vector<2x4xf32>
    %17 = math.exp %16 : vector<2x4xf32>
    %cst_14 = arith.constant 1.000000e+00 : f32
    %18 = vector.broadcast %cst_14 : f32 to vector<2x4xf32>
    %19 = arith.addf %18, %17 : vector<2x4xf32>
    %20 = arith.divf %18, %19 : vector<2x4xf32>
    %21 = vector.shape_cast %20 : vector<2x4xf32> to vector<2x4x1xf32>
    %22 = vector.broadcast %21 : vector<2x4x1xf32> to vector<2x4x256xf32>
    %23 = arith.mulf %0, %22 : vector<2x4x256xf32>
    %c0_15 = arith.constant 0 : index
    %c0_16 = arith.constant 0 : index
    %c0_17 = arith.constant 0 : index
    %24 = vector.load %arg6[%c0_15, %c0_16, %c0_17] : memref<2x4x256xf32, #tpu.memory_space<vmem>>, vector<2x4x256xf32>
    tpu.vector_store %arg6[%c0_15, %c0_16, %c0_17], %23 {strides = array<i32>} : memref<2x4x256xf32, #tpu.memory_space<vmem>>, vector<2x4x256xf32>,
    return
  }
  func.func @transform_0(%arg0: i32) -> (i32, i32, i32) {
    %c0_i32 = arith.constant 0 : i32
    %c0_i32_0 = arith.constant 0 : i32
    %c0_i32_1 = arith.constant 0 : i32
    return %arg0, %c0_i32, %c0_i32_0 : i32, i32, i32
  }
  func.func @transform_1(%arg0: i32) -> (i32, i32) {
    %c0_i32 = arith.constant 0 : i32
    %c0_i32_0 = arith.constant 0 : i32
    %c0_i32_1 = arith.constant 0 : i32
    return %c0_i32, %c0_i32_0 : i32, i32
  }
  func.func @transform_2(%arg0: i32) -> (i32, i32) {
    %c0_i32 = arith.constant 0 : i32
    %c0_i32_0 = arith.constant 0 : i32
    %c0_i32_1 = arith.constant 0 : i32
    return %c0_i32, %c0_i32_0 : i32, i32
  }
  func.func @transform_3(%arg0: i32) -> (i32, i32) {
    %c0_i32 = arith.constant 0 : i32
    %c0_i32_0 = arith.constant 0 : i32
    %c0_i32_1 = arith.constant 0 : i32
    return %c0_i32, %c0_i32_0 : i32, i32
  }
  func.func @transform_4(%arg0: i32) -> (i32, i32) {
    %c0_i32 = arith.constant 0 : i32
    %c0_i32_0 = arith.constant 0 : i32
    %c0_i32_1 = arith.constant 0 : i32
    return %c0_i32, %c0_i32_0 : i32, i32
  }
  func.func @transform_5(%arg0: i32) -> (i32, i32, i32) {
    %c0_i32 = arith.constant 0 : i32
    %c0_i32_0 = arith.constant 0 : i32
    %c0_i32_1 = arith.constant 0 : i32
    return %arg0, %c0_i32, %c0_i32_0 : i32, i32, i32
  }
}

</mosaic_0001>

<llo_original>
// kernel: tpu_custom_call.1
$region0: #{tpu_custom_call.1}
  #allocation0 [shape = 'u32[]', space=smem, size = 0x4, offset = 0x4, fixed_abs, tag = 'smem constant byte address 0x4 - core index']
  #allocation1 [shape = 'u32[144,128]{1,0:T(1,128)}', space=vmem, size = 0x12000, scoped, tag = 'internal scratch']
  %s0 = inlined_call_operand.hbm [shape: f32[2,4,256], index: 0, kind: input, shape index: {}]
  %s1 = inlined_call_operand.vmem [shape: f32[4,2], index: 1, kind: input, shape index: {}]
  %s2 = inlined_call_operand.vmem [shape: f32[1,2], index: 2, kind: input, shape index: {}]
  %s3 = inlined_call_operand.vmem [shape: f32[2,4], index: 3, kind: input, shape index: {}]
  %s4 = inlined_call_operand.vmem [shape: f32[1,4], index: 4, kind: input, shape index: {}]
  %s5 = inlined_call_operand.hbm [shape: f32[2,4,256], index: 5, kind: output, shape index: {}]
  %s6 = sld [smem:[#allocation0]]
  $region34: #{tpu_custom_call.1} parent=0
    _
  %s8 = ssub.s32 1, %s6
  %s9 = scalar_select 0, %s8, %s6
  $region1: #{tpu_custom_call.1} parent=0
    #allocation2 [shape = 'u8[8192]{0}', space=vmem, size = 0x2000, scoped, tag = 'input window, operand 0, single buffered']
    #allocation3 [shape = 's32[1]{0}', space=sflag, size = 0x4, scoped, tag = 'scoped memory for tpu_custom_call.1']
    #allocation4 [shape = 's32[1]{0}', space=sflag, size = 0x4, scoped, tag = 'scoped memory for tpu_custom_call.1']
    #allocation5 [shape = 'u8[8192]{0}', space=vmem, size = 0x2000, scoped, tag = 'output window, operand 0, single buffered']
    %10 = vsyncpa [#allocation3], 0
    %11 = vsyncpa [#allocation4], 0
    // Predicated region
    $region2: #{tpu_custom_call.1} parent=1 // pred_check
      _
    $region3: #{tpu_custom_call.1} parent=1 // pred_check_branch
      %13 = sbr.rel (0) target = $region5
    $region4: #{tpu_custom_call.1} parent=1 // pred_region
      %s15 = ssub.s32 256, 256
      %16 = vsyncadd [#allocation3], %s15
      %s17 = sshll.u32 [#allocation2], 4
      %s18 = int_to_ptr.vmem [resolvable:$true] %s17
      %23 = dma.hbm_to_vmem [thread:$0]  %s0, 256, %s18, [#allocation3], 128, 128, 8
    $region5: #{tpu_custom_call.1} parent=1 // pred_fallthru
      _
    // Predicated region
    $region6: #{tpu_custom_call.1} parent=1 // pred_check
      _
    $region7: #{tpu_custom_call.1} parent=1 // pred_check_branch
      %25 = sbr.rel (0) target = $region9
    $region8: #{tpu_custom_call.1} parent=1 // pred_region
      _
    $region9: #{tpu_custom_call.1} parent=1 // pred_fallthru
      _
    // Predicated region
    $region10: #{tpu_custom_call.1} parent=1 // pred_check
      _
    $region11: #{tpu_custom_call.1} parent=1 // pred_check_branch
      %27 = sbr.rel (0) target = $region13
    $region12: #{tpu_custom_call.1} parent=1 // pred_region
      _
    $region13: #{tpu_custom_call.1} parent=1 // pred_fallthru
      _
    // Predicated region
    $region14: #{tpu_custom_call.1} parent=1 // pred_check
      _
    $region15: #{tpu_custom_call.1} parent=1 // pred_check_branch
      %29 = sbr.rel (0) target = $region17
    $region16: #{tpu_custom_call.1} parent=1 // pred_region
      _
    $region17: #{tpu_custom_call.1} parent=1 // pred_fallthru
      _
    // Predicated region
    $region18: #{tpu_custom_call.1} parent=1 // pred_check
      _
    $region19: #{tpu_custom_call.1} parent=1 // pred_check_branch
      %31 = sbr.rel (0) target = $region21
    $region20: #{tpu_custom_call.1} parent=1 // pred_region
      _
    $region21: #{tpu_custom_call.1} parent=1 // pred_fallthru
      _
    // Predicated region
    $region22: #{tpu_custom_call.1} parent=1 // pred_check
      _
    $region23: #{tpu_custom_call.1} parent=1 // pred_check_branch
      %33 = sbr.rel (0) target = $region25
    $region24: #{tpu_custom_call.1} parent=1 // pred_region
      %34 = dma.done [#allocation3], 256
    $region25: #{tpu_custom_call.1} parent=1 // pred_fallthru
      _
    %v35 = vld [vmem:[#allocation2] sm:$0xff]
    %v36 = vld [vmem:[#allocation2 + $0x8] sm:$0xff]
    %v39 = vcombine.high %v35, %v35
    %v40 = vcombine.high %v36, %v36
    %vm43 = vcmask 1043456
    %v44 = vsel %vm43, %v35, 0.0
    %v45 = vsel %vm43, %v39, 0.0
    %v46 = vadd.f32 %v44, %v45
    %47 = vadd.xlane.f32.xlu0 %v46
    %v48 = vpop.xlane.xlu0 %47
    %v49 = vsel %vm43, %v36, 0.0
    %v50 = vsel %vm43, %v40, 0.0
    %v51 = vadd.f32 %v49, %v50
    %52 = vadd.xlane.f32.xlu0 %v51
    %v53 = vpop.xlane.xlu0 %52
    %v54 = vrcp.pop 256.0
    %v55 = vmul.f32 %v48, %v54
    %v56 = vmul.f32 %v53, %v54
    %v57 = vld [vmem:[%s1] sm:$0xf]
    %v58 = vld [vmem:[%s2] sm:$0x1]
    %v60 = vlaneseq
    %v61 = vshrl.u32 %v60, 7
    %v62 = vsub.s32 0, %v61
    %v63 = vrot.slane %v58, %v62
    %v67 = vlaneseq
    %v68 = vand.u32 %v67, 127
    %v69 = vlaneseq
    %v70 = vshrl.u32 %v69, 7
    %v71 = vsub.s32 %v68, %v70
    %v72 = vrot.slane %v55, %v71
    %v73 = vlaneseq
    %v74 = vshrl.u32 %v73, 7
    %v75 = vsub.s32 %v68, %v74
    %v76 = vrot.slane %v56, %v75
    %vm77 = vcmask 1041409
    %v78 = vsel %vm77, %v76, %v72
    %vm79 = vcmask 31744
    %v80 = vsel %vm79, %v78, 0
    %v83 = vsel %vm43, %v57, 0
    %85 = vmatprep.subr.mxu0 0.0
    %86 = vmatpush1.msra.mxu0 %v83
    %87 = vmatprep.subr.mxu0 0.0
    %88 = vmatpush1.msra.mxu0 0.0
    %89 = vmatprep.subr.mxu0 0.0
    %90 = vmatpush1.msra.mxu0 0.0
    %91 = vmatprep.subr.mxu0 0.0
    %92 = vmatpush1.msra.mxu0 0.0
    %93 = vmatprep.subr.mxu0 0.0
    %94 = vmatpush1.msra.mxu0 0.0
    %95 = vmatprep.subr.mxu0 0.0
    %96 = vmatpush1.msra.mxu0 0.0
    %97 = vmatprep.subr.mxu0 0.0
    %98 = vmatpush1.msra.mxu0 0.0
    %99 = vmatprep.subr.mxu0 0.0
    %100 = vmatpush1.msra.mxu0 0.0
    %101 = vmatprep.subr.mxu0 0.0
    %102 = vmatpush1.msra.mxu0 0.0
    %103 = vmatprep.subr.mxu0 0.0
    %104 = vmatpush1.msra.mxu0 0.0
    %105 = vmatprep.subr.mxu0 0.0
    %106 = vmatpush1.msra.mxu0 0.0
    %107 = vmatprep.subr.mxu0 0.0
    %108 = vmatpush1.msra.mxu0 0.0
    %109 = vmatprep.subr.mxu0 0.0
    %110 = vmatpush1.msra.mxu0 0.0
    %111 = vmatprep.subr.mxu0 0.0
    %112 = vmatpush1.msra.mxu0 0.0
    %113 = vmatprep.subr.mxu0 0.0
    %114 = vmatpush1.msra.mxu0 0.0
    %115 = vmatprep.subr.mxu0 0.0
    %116 = vmatpush1.msra.mxu0 0.0
    %117 = vmatprep.subr.mxu0 0.0
    %118 = vmatpush1.msra.mxu0 0.0
    %119 = vmatprep.subr.mxu0 0.0
    %120 = vmatpush1.msra.mxu0 0.0
    %121 = vmatprep.subr.mxu0 0.0
    %122 = vmatpush1.msra.mxu0 0.0
    %123 = vmatprep.subr.mxu0 0.0
    %124 = vmatpush1.msra.mxu0 0.0
    %125 = vmatprep.subr.mxu0 0.0
    %126 = vmatpush1.msra.mxu0 0.0
    %127 = vmatprep.subr.mxu0 0.0
    %128 = vmatpush1.msra.mxu0 0.0
    %129 = vmatprep.subr.mxu0 0.0
    %130 = vmatpush1.msra.mxu0 0.0
    %131 = vmatprep.subr.mxu0 0.0
    %132 = vmatpush1.msra.mxu0 0.0
    %133 = vmatprep.subr.mxu0 0.0
    %134 = vmatpush1.msra.mxu0 0.0
    %135 = vmatprep.subr.mxu0 0.0
    %136 = vmatpush1.msra.mxu0 0.0
    %137 = vmatprep.subr.mxu0 0.0
    %138 = vmatpush1.msra.mxu0 0.0
    %139 = vmatprep.subr.mxu0 0.0
    %140 = vmatpush1.msra.mxu0 0.0
    %141 = vmatprep.subr.mxu0 0.0
    %142 = vmatpush1.msra.mxu0 0.0
    %143 = vmatprep.subr.mxu0 0.0
    %144 = vmatpush1.msra.mxu0 0.0
    %145 = vmatprep.subr.mxu0 0.0
    %146 = vmatpush1.msra.mxu0 0.0
    %147 = vmatprep.subr.mxu0 0.0
    %148 = vmatpush1.msra.mxu0 0.0
    %149 = vmatprep.mubr.f32.mxu0 0.0
    %150 = vmatmul.mubr.f32.gmra.mrb[0].mxu0 %v80
    %v151 = vpop.f32.mrb[0].mxu0
    %v152 = vadd.f32 %v63, %v151
    %v153 = vpop.f32.mrb[0].mxu0
    %154 = vdwg.mxu0
    %v155 = vmax.f32 %v152, 0.0
    %v156 = vld [vmem:[%s3] sm:$0x3]
    %v157 = vld [vmem:[%s4] sm:$0x1]
    %v159 = vlaneseq
    %v160 = vshrl.u32 %v159, 7
    %v161 = vsub.s32 0, %v160
    %v162 = vrot.slane %v157, %v161
    %vm164 = vcmask 15360
    %v166 = vsel %vm164, %v155, 0
    %vm168 = vcmask 1041408
    %v170 = vsel %vm168, %v156, 0
    %172 = vmatprep.subr.mxu0 0.0
    %173 = vmatpush1.msra.mxu0 %v170
    %174 = vmatprep.subr.mxu0 0.0
    %175 = vmatpush1.msra.mxu0 0.0
    %176 = vmatprep.subr.mxu0 0.0
    %177 = vmatpush1.msra.mxu0 0.0
    %178 = vmatprep.subr.mxu0 0.0
    %179 = vmatpush1.msra.mxu0 0.0
    %180 = vmatprep.subr.mxu0 0.0
    %181 = vmatpush1.msra.mxu0 0.0
    %182 = vmatprep.subr.mxu0 0.0
    %183 = vmatpush1.msra.mxu0 0.0
    %184 = vmatprep.subr.mxu0 0.0
    %185 = vmatpush1.msra.mxu0 0.0
    %186 = vmatprep.subr.mxu0 0.0
    %187 = vmatpush1.msra.mxu0 0.0
    %188 = vmatprep.subr.mxu0 0.0
    %189 = vmatpush1.msra.mxu0 0.0
    %190 = vmatprep.subr.mxu0 0.0
    %191 = vmatpush1.msra.mxu0 0.0
    %192 = vmatprep.subr.mxu0 0.0
    %193 = vmatpush1.msra.mxu0 0.0
    %194 = vmatprep.subr.mxu0 0.0
    %195 = vmatpush1.msra.mxu0 0.0
    %196 = vmatprep.subr.mxu0 0.0
    %197 = vmatpush1.msra.mxu0 0.0
    %198 = vmatprep.subr.mxu0 0.0
    %199 = vmatpush1.msra.mxu0 0.0
    %200 = vmatprep.subr.mxu0 0.0
    %201 = vmatpush1.msra.mxu0 0.0
    %202 = vmatprep.subr.mxu0 0.0
    %203 = vmatpush1.msra.mxu0 0.0
    %204 = vmatprep.subr.mxu0 0.0
    %205 = vmatpush1.msra.mxu0 0.0
    %206 = vmatprep.subr.mxu0 0.0
    %207 = vmatpush1.msra.mxu0 0.0
    %208 = vmatprep.subr.mxu0 0.0
    %209 = vmatpush1.msra.mxu0 0.0
    %210 = vmatprep.subr.mxu0 0.0
    %211 = vmatpush1.msra.mxu0 0.0
    %212 = vmatprep.subr.mxu0 0.0
    %213 = vmatpush1.msra.mxu0 0.0
    %214 = vmatprep.subr.mxu0 0.0
    %215 = vmatpush1.msra.mxu0 0.0
    %216 = vmatprep.subr.mxu0 0.0
    %217 = vmatpush1.msra.mxu0 0.0
    %218 = vmatprep.subr.mxu0 0.0
    %219 = vmatpush1.msra.mxu0 0.0
    %220 = vmatprep.subr.mxu0 0.0
    %221 = vmatpush1.msra.mxu0 0.0
    %222 = vmatprep.subr.mxu0 0.0
    %223 = vmatpush1.msra.mxu0 0.0
    %224 = vmatprep.subr.mxu0 0.0
    %225 = vmatpush1.msra.mxu0 0.0
    %226 = vmatprep.subr.mxu0 0.0
    %227 = vmatpush1.msra.mxu0 0.0
    %228 = vmatprep.subr.mxu0 0.0
    %229 = vmatpush1.msra.mxu0 0.0
    %230 = vmatprep.subr.mxu0 0.0
    %231 = vmatpush1.msra.mxu0 0.0
    %232 = vmatprep.subr.mxu0 0.0
    %233 = vmatpush1.msra.mxu0 0.0
    %234 = vmatprep.subr.mxu0 0.0
    %235 = vmatpush1.msra.mxu0 0.0
    %236 = vmatprep.mubr.f32.mxu0 0.0
    %237 = vmatmul.mubr.f32.gmra.mrb[0].mxu0 %v166
    %v238 = vpop.f32.mrb[0].mxu0
    %v239 = vadd.f32 %v162, %v238
    %v240 = vpop.f32.mrb[0].mxu0
    %241 = vdwg.mxu0
    %v242 = vxor.u32 %v239, 2147483648
    %v243 = vmul.f32 %v242, 1.442695
    %v244 = vpow.pop %v243
    %v245 = vadd.f32 %v244, 1.0
    %v246 = vrcp.pop %v245
    %v247 = vmul.f32 1.0, %v246
    %v248 = vlaneseq
    %v249 = vshrl.u32 %v248, 7
    %v250 = vsub.s32 0, %v249
    %v251 = vrot.slane %v247, %v250
    %253 = vbcast.lane.b32.xlu0 %v251, 256
    %v254 = vpop.permute.xlu0 %253
    %v255 = vlaneseq
    %v256 = vshrl.u32 %v255, 7
    %v257 = vsub.s32 1, %v256
    %v258 = vrot.slane %v247, %v257
    %260 = vbcast.lane.b32.xlu0 %v258, 256
    %v261 = vpop.permute.xlu0 %260
    %v265 = vunpack.c.l.s4 839922192
    %v266 = vunpack.c.0.s8 %v265
    %v267 = vlaneseq
    %v268 = vshrl.u32 %v267, 7
    %v269 = vsub.s32 %v266, %v268
    %v270 = vrot.slane %v254, %v269
    %v272 = vunpack.c.l.s4 839922192
    %v273 = vunpack.c.0.s8 %v272
    %v274 = vlaneseq
    %v275 = vshrl.u32 %v274, 7
    %v276 = vsub.s32 %v273, %v275
    %v277 = vrot.slane %v261, %v276
    %v280 = vmul.f32 %v35, %v270
    %v281 = vmul.f32 %v36, %v277
    %282 = vst [vmem:[#allocation5] sm:$0xff] %v280
    %283 = vst [vmem:[#allocation5 + $0x8] sm:$0xff] %v281
    // Predicated region
    $region26: #{tpu_custom_call.1} parent=1 // pred_check
      _
    $region27: #{tpu_custom_call.1} parent=1 // pred_check_branch
      %285 = sbr.rel (0) target = $region29
    $region28: #{tpu_custom_call.1} parent=1 // pred_region
      %s287 = ssub.s32 256, 256
      %288 = vsyncadd [#allocation4], %s287
      %s289 = sshll.u32 [#allocation5], 4
      %s290 = int_to_ptr.vmem [resolvable:$true] %s289
      %295 = dma.vmem_to_hbm [thread:$0]  %s290, 256, %s5, [#allocation4], 128, 128, 8
    $region29: #{tpu_custom_call.1} parent=1 // pred_fallthru
      _
    // Predicated region
    $region30: #{tpu_custom_call.1} parent=1 // pred_check
      _
    $region31: #{tpu_custom_call.1} parent=1 // pred_check_branch
      %297 = sbr.rel (0) target = $region33
    $region32: #{tpu_custom_call.1} parent=1 // pred_region
      %298 = dma.done [#allocation4], 256
    $region33: #{tpu_custom_call.1} parent=1 // pred_fallthru
      _
    %299 = vsyncpa [#allocation3], 1
    %300 = vsyncpa [#allocation4], 1

</llo_original>
